<compile_context>
chip_gen: v7x
topology: tpu7x:2x2x1
jax: 0.10.0
libtpu: 0.0.40
codegen_flags: <defaults>
</compile_context>

<pallas_src>
import jax
import jax.numpy as jnp
from jax.experimental import pallas as pl
from jax.experimental.pallas import tpu as pltpu


def _group_dropout_kernel(scale_ref, hidden_ref, out_ref):
    # scale_ref  : (1, TC)  per-element keep/compensation scale (hidden.dtype)
    # hidden_ref : (TB, TC) lane-dense tile of the flattened activations
    # out_ref    : (TB, TC)
    out_ref[...] = (hidden_ref[...] * scale_ref[...]).astype(out_ref.dtype)


def _vmem_and_target_bytes():
    """Generation-aware per-block byte target and explicit scoped-VMEM limit."""
    vmem_cap = 128 << 20
    try:
        vmem_cap = int(pltpu.get_tpu_info().vmem_capacity_bytes)
    except Exception:
        # interpret mode / attribute rename / non-TPU tracing: assume 128 MiB
        pass
    if vmem_cap <= (64 << 20):            # v7x: 64 MiB VMEM per TensorCore
        return 8 << 20, 48 << 20          # 8 MiB blocks, 48 MiB scoped VMEM
    return 12 << 20, 96 << 20             # v5e / v6e: 128 MiB physical VMEM


def _choose_tiles(B, UD, itemsize, target_block_bytes):
    """Pick (batch tile, lane tile) so a single block stays under the target.

    Block-shape rules: second-to-last dim must be a multiple of 8 or == B,
    last dim a multiple of 128 or == UD (full).
    """
    if UD % 128 == 0:
        # Bound the lane tile so even an 8-row block fits the byte target.
        max_tc = max(128, (target_block_bytes // (8 * itemsize)) // 128 * 128)
        tc = min(UD, max_tc)
    else:
        # Non-128-multiple last dim: lane block must be full UD (stores become
        # masked vst.msk).  TODO(synk): pad UD to a 128-multiple in the wrapper
        # if this path ever shows up hot (trades an extra copy for dense vst).
        tc = UD

    row_bytes = tc * itemsize
    tb = max(1, target_block_bytes // max(1, row_bytes))
    if tb >= B:
        tb = B                                # full batch: block dim == array dim
    else:
        tb = max(8, (tb // 8) * 8)            # 8-aligned second-to-last block dim
        tb = min(tb, B)

    # Ensure a few grid steps so both v7x TensorCores and the double-buffered
    # pipeline get work (only when B can be split on 8-row boundaries).
    if pl.cdiv(B, tb) * pl.cdiv(UD, tc) < 4 and B >= 32:
        forced = max(8, (pl.cdiv(B, 4) // 8) * 8)
        tb = min(tb, forced)
    return tb, tc


def group_dropout(hidden, p, *, key=None, seed=0, training=True, donate=False):
    """Pallas GroupDropout forward.

    hidden: (B, U, D) float array
    p:      scalar, (1,), or (U,) dropout probabilities in [0, 1]
    key:    optional jax PRNG key; if None, derived from `seed`.
    donate: alias the output onto the (flattened) input buffer.  Only safe if
            the caller no longer needs `hidden`.
    """
    if not training:
        return hidden

    p = jnp.asarray(p, jnp.float32).reshape(-1)
    B, U, D = hidden.shape
    if p.shape[0] not in (1, U):
        raise ValueError("illegal dimension of dropout probs")

    if key is None:
        key = jax.random.PRNGKey(seed)

    # One Bernoulli(keep) draw per unit (or a single shared draw for scalar p),
    # fused with the 1/(1-p) compensation.  O(U) work done once in the wrapper;
    # identical for every tile by construction.
    keep_prob = 1.0 - p                                         # (1,) or (U,)
    mask = jax.random.bernoulli(key, keep_prob).astype(jnp.float32)
    # p == 1.0 guard: dropped units get scale 0, never inf/NaN.
    scale_u = jnp.where(mask > 0, mask / jnp.maximum(keep_prob, 1e-12), 0.0)
    scale_u = jnp.broadcast_to(scale_u, (U,))                   # (U,)

    # Lane-dense layout: (B, U, D) -> (B, U*D); scale expanded to (1, U*D) and
    # cast to the activation dtype (native bf16 multiply on v6e/v7x VPU, no
    # f32 promotion / down-cast on store).
    UD = U * D
    x2 = hidden.reshape(B, UD)
    scale = jnp.broadcast_to(scale_u[:, None], (U, D)).reshape(1, UD)
    scale = scale.astype(hidden.dtype)

    itemsize = jnp.dtype(hidden.dtype).itemsize
    target_bytes, vmem_cap_limit = _vmem_and_target_bytes()
    tb, tc = _choose_tiles(B, UD, itemsize, target_bytes)

    block_bytes = tb * tc * itemsize
    scale_bytes = tc * itemsize
    # VMEM footprint: 2x hidden block + 2x out block + 2x tiny scale + headroom.
    vmem_limit = int(min(vmem_cap_limit,
                         max(32 << 20, 4 * block_bytes + 2 * scale_bytes + (4 << 20))))

    grid = (pl.cdiv(B, tb), pl.cdiv(UD, tc))

    out2 = pl.pallas_call(
        _group_dropout_kernel,
        out_shape=jax.ShapeDtypeStruct((B, UD), hidden.dtype),
        grid_spec=pltpu.PrefetchScalarGridSpec(
            num_scalar_prefetch=0,
            grid=grid,
            in_specs=[
                # scale: one tiny lane-tile, constant across the batch axis.
                pl.BlockSpec((1, tc), lambda b, c: (0, c)),
                # hidden: tiles batch x lanes; auto double-buffered.
                pl.BlockSpec((tb, tc), lambda b, c: (b, c)),
            ],
            out_specs=pl.BlockSpec((tb, tc), lambda b, c: (b, c)),
        ),
        compiler_params=pltpu.CompilerParams(
            dimension_semantics=("parallel", "parallel"),
            vmem_limit_bytes=vmem_limit,
        ),
        input_output_aliases=({1: 0} if donate else {}),
    )(scale, x2)

    return out2.reshape(B, U, D)


if __name__ == "__main__":
    key = jax.random.PRNGKey(0)
    kh, kd = jax.random.split(key)

    B, U, D = 2, 8, 128
    hidden = jax.random.normal(kh, (B, U, D), dtype=jnp.float32)
    # deterministic per-unit dropout probabilities in [0.05, 0.75]
    p = jnp.linspace(0.05, 0.75, U).astype(jnp.float32)

    out = group_dropout(hidden, p, key=kd, training=True)
    out = jax.block_until_ready(out)

    # sanity: each unit is either entirely dropped (0) or scaled by 1/(1-p_u)
    ok = True
    for u in range(U):
        comp = 1.0 / (1.0 - float(p[u]))
        kept = bool(jnp.allclose(out[:, u, :], hidden[:, u, :] * comp, atol=1e-5))
        dropped = bool(jnp.allclose(out[:, u, :], 0.0, atol=1e-6))
        ok = ok and (kept or dropped)
    assert ok, "GroupDropout output is not a per-unit keep/drop of the input"

    # exact match against a pure-JAX reference built with the same key
    keep_prob = 1.0 - p
    mask = jax.random.bernoulli(kd, keep_prob).astype(jnp.float32)
    ref = hidden * (mask / keep_prob)[None, :, None]
    assert bool(jnp.allclose(out, ref, atol=1e-6)), "mismatch vs pure-JAX reference"

    # scalar-p branch: a single shared Bernoulli draw for all units
    out_scalar = group_dropout(hidden, 0.3, key=kd, training=True)
    out_scalar = jax.block_until_ready(out_scalar)
    comp = 1.0 / 0.7
    all_kept = bool(jnp.allclose(out_scalar, hidden * comp, atol=1e-5))
    all_dropped = bool(jnp.allclose(out_scalar, 0.0, atol=1e-6))
    assert all_kept or all_dropped, "scalar-p branch must share one draw"

    # bf16 activations: scale is cast to bf16, store dtype matches
    out_bf16 = group_dropout(hidden.astype(jnp.bfloat16), p, key=kd, training=True)
    out_bf16 = jax.block_until_ready(out_bf16)
    assert out_bf16.dtype == jnp.bfloat16
    assert bool(jnp.allclose(out_bf16.astype(jnp.float32), ref, atol=3e-2, rtol=3e-2))

    # p == 1.0 edge case: unit is fully dropped, no NaN/inf
    p_one = p.at[0].set(1.0)
    out_one = jax.block_until_ready(group_dropout(hidden, p_one, key=kd, training=True))
    assert bool(jnp.all(jnp.isfinite(out_one)))
    assert bool(jnp.allclose(out_one[:, 0, :], 0.0))

    # eval mode is the identity
    assert bool(jnp.array_equal(group_dropout(hidden, p, training=False), hidden))

    print("KERNEL_OK")
</pallas_src>

<mosaic_0001>
module attributes {stable_mosaic.version = 11 : i64} {
  func.func @_group_dropout_kernel(%arg0: i32, %arg1: i32, %arg2: memref<1x1024xf32, #tpu.memory_space<vmem>>, %arg3: memref<2x1024xf32, #tpu.memory_space<vmem>>, %arg4: memref<2x1024xf32, #tpu.memory_space<vmem>>) attributes {dimension_semantics = [#tpu.dimension_semantics<parallel>, #tpu.dimension_semantics<parallel>], iteration_bounds = array<i64: 1, 1>, scalar_prefetch = 0 : i64, scratch_operands = 0 : i64, tpu.core_type = #tpu.core_type<tc>, window_params = [{transform_indices = @transform_0, window_bounds = array<i64: 1, 1024>}, {transform_indices = @transform_1, window_bounds = array<i64: 2, 1024>}, {transform_indices = @transform_2, window_bounds = array<i64: 2, 1024>}]} {
    %c0 = arith.constant 0 : index
    %c0_0 = arith.constant 0 : index
    %0 = vector.load %arg3[%c0, %c0_0] : memref<2x1024xf32, #tpu.memory_space<vmem>>, vector<2x1024xf32>
    %c0_1 = arith.constant 0 : index
    %c0_2 = arith.constant 0 : index
    %1 = vector.load %arg2[%c0_1, %c0_2] : memref<1x1024xf32, #tpu.memory_space<vmem>>, vector<1x1024xf32>
    %2 = vector.broadcast %1 : vector<1x1024xf32> to vector<2x1024xf32>
    %3 = arith.mulf %0, %2 : vector<2x1024xf32>
    %c0_3 = arith.constant 0 : index
    %c0_4 = arith.constant 0 : index
    %4 = vector.load %arg4[%c0_3, %c0_4] : memref<2x1024xf32, #tpu.memory_space<vmem>>, vector<2x1024xf32>
    tpu.vector_store %arg4[%c0_3, %c0_4], %3 {strides = array<i32>} : memref<2x1024xf32, #tpu.memory_space<vmem>>, vector<2x1024xf32>,
    return
  }
  func.func @transform_0(%arg0: i32, %arg1: i32) -> (i32, i32) {
    %c0_i32 = arith.constant 0 : i32
    %c0_i32_0 = arith.constant 0 : i32
    return %c0_i32, %arg1 : i32, i32
  }
  func.func @transform_1(%arg0: i32, %arg1: i32) -> (i32, i32) {
    %c0_i32 = arith.constant 0 : i32
    return %arg0, %arg1 : i32, i32
  }
  func.func @transform_2(%arg0: i32, %arg1: i32) -> (i32, i32) {
    %c0_i32 = arith.constant 0 : i32
    return %arg0, %arg1 : i32, i32
  }
}

</mosaic_0001>

<llo_original>
// kernel: tpu_custom_call.1
$region0: #{tpu_custom_call.1}
  #allocation0 [shape = 'u32[]', space=smem, size = 0x4, offset = 0x4, fixed_abs, tag = 'smem constant byte address 0x4 - core index']
  #allocation1 [shape = 'u32[144,128]{1,0:T(1,128)}', space=vmem, size = 0x12000, scoped, tag = 'internal scratch']
  %s0 = inlined_call_operand.hbm [shape: f32[1,1024], index: 0, kind: input, shape index: {}]
  %s1 = inlined_call_operand.hbm [shape: f32[2,1024], index: 1, kind: input, shape index: {}]
  %s2 = inlined_call_operand.hbm [shape: f32[2,1024], index: 2, kind: output, shape index: {}]
  %s3 = sld [smem:[#allocation0]]
  $region26: #{tpu_custom_call.1} parent=0
    _
  %s5 = ssub.s32 1, %s3
  %s6 = scalar_select 0, %s5, %s3
  $region1: #{tpu_custom_call.1} parent=0
    #allocation2 [shape = 'u8[4096]{0}', space=vmem, size = 0x1000, scoped, tag = 'input window, operand 0, single buffered']
    #allocation3 [shape = 's32[1]{0}', space=sflag, size = 0x4, scoped, tag = 'scoped memory for tpu_custom_call.1']
    #allocation4 [shape = 's32[1]{0}', space=sflag, size = 0x4, scoped, tag = 'scoped memory for tpu_custom_call.1']
    #allocation5 [shape = 'u8[8192]{0}', space=vmem, size = 0x2000, scoped, tag = 'input window, operand 1, single buffered']
    #allocation6 [shape = 's32[1]{0}', space=sflag, size = 0x4, scoped, tag = 'scoped memory for tpu_custom_call.1']
    #allocation7 [shape = 'u8[8192]{0}', space=vmem, size = 0x2000, scoped, tag = 'output window, operand 0, single buffered']
    %7 = vsyncpa [#allocation3], 0
    %8 = vsyncpa [#allocation6], 0
    %9 = vsyncpa [#allocation4], 0
    // Predicated region
    $region2: #{tpu_custom_call.1} parent=1 // pred_check
      _
    $region3: #{tpu_custom_call.1} parent=1 // pred_check_branch
      %11 = sbr.rel (0) target = $region5
    $region4: #{tpu_custom_call.1} parent=1 // pred_region
      %s13 = ssub.s32 128, 128
      %14 = vsyncadd [#allocation3], %s13
      %s16 = sshll.u32 [#allocation2], 4
      %s17 = int_to_ptr.vmem [resolvable:$true] %s16
      %19 = dma.hbm_to_vmem [thread:$0]  %s0, 128, %s17, [#allocation3]
    $region5: #{tpu_custom_call.1} parent=1 // pred_fallthru
      _
    // Predicated region
    $region6: #{tpu_custom_call.1} parent=1 // pred_check
      _
    $region7: #{tpu_custom_call.1} parent=1 // pred_check_branch
      %21 = sbr.rel (0) target = $region9
    $region8: #{tpu_custom_call.1} parent=1 // pred_region
      %s23 = ssub.s32 256, 256
      %24 = vsyncadd [#allocation6], %s23
      %s26 = sshll.u32 [#allocation5], 4
      %s27 = int_to_ptr.vmem [resolvable:$true] %s26
      %29 = dma.hbm_to_vmem [thread:$0]  %s1, 256, %s27, [#allocation6]
    $region9: #{tpu_custom_call.1} parent=1 // pred_fallthru
      _
    // Predicated region
    $region10: #{tpu_custom_call.1} parent=1 // pred_check
      _
    $region11: #{tpu_custom_call.1} parent=1 // pred_check_branch
      %31 = sbr.rel (0) target = $region13
    $region12: #{tpu_custom_call.1} parent=1 // pred_region
      %32 = dma.done [#allocation3], 128
    $region13: #{tpu_custom_call.1} parent=1 // pred_fallthru
      _
    // Predicated region
    $region14: #{tpu_custom_call.1} parent=1 // pred_check
      _
    $region15: #{tpu_custom_call.1} parent=1 // pred_check_branch
      %34 = sbr.rel (0) target = $region17
    $region16: #{tpu_custom_call.1} parent=1 // pred_region
      %35 = dma.done [#allocation6], 256
    $region17: #{tpu_custom_call.1} parent=1 // pred_fallthru
      _
    %v36 = vld [vmem:[#allocation5] sm:$0xff]
    %v37 = vld [vmem:[#allocation5 + $0x8] sm:$0xff]
    %v38 = vld [vmem:[#allocation2] sm:$0xff]
    %v40 = vlaneseq
    %v41 = vshrl.u32 %v40, 7
    %v42 = vsub.s32 0, %v41
    %v43 = vrot.slane %v38, %v42
    %v44 = vlaneseq
    %v45 = vshrl.u32 %v44, 7
    %v46 = vsub.s32 1, %v45
    %v47 = vrot.slane %v38, %v46
    %v48 = vlaneseq
    %v49 = vshrl.u32 %v48, 7
    %v50 = vsub.s32 2, %v49
    %v51 = vrot.slane %v38, %v50
    %v52 = vlaneseq
    %v53 = vshrl.u32 %v52, 7
    %v54 = vsub.s32 3, %v53
    %v55 = vrot.slane %v38, %v54
    %v56 = vlaneseq
    %v57 = vshrl.u32 %v56, 7
    %v58 = vsub.s32 4, %v57
    %v59 = vrot.slane %v38, %v58
    %v60 = vlaneseq
    %v61 = vshrl.u32 %v60, 7
    %v62 = vsub.s32 5, %v61
    %v63 = vrot.slane %v38, %v62
    %v64 = vlaneseq
    %v65 = vshrl.u32 %v64, 7
    %v66 = vsub.s32 6, %v65
    %v67 = vrot.slane %v38, %v66
    %v68 = vlaneseq
    %v69 = vshrl.u32 %v68, 7
    %v70 = vsub.s32 7, %v69
    %v71 = vrot.slane %v38, %v70
    %v72 = vcombine.low %v43, %v47
    %v73 = vcombine.low %v51, %v55
    %v75 = vunpack.c.l.s4 1983009808
    %v76 = vunpack.c.0.s8 %v75
    %v77 = vlaneseq
    %v78 = vshrl.u32 %v77, 7
    %v79 = vsub.s32 %v76, %v78
    %v80 = vrot.slane %v72, %v79
    %v82 = vunpack.c.l.s4 1983009808
    %v83 = vunpack.c.0.s8 %v82
    %v84 = vlaneseq
    %v85 = vshrl.u32 %v84, 7
    %v86 = vsub.s32 %v83, %v85
    %v87 = vrot.slane %v73, %v86
    %v88 = vcombine.low %v80, %v87
    %v89 = vcombine.low %v59, %v63
    %v90 = vcombine.low %v67, %v71
    %v92 = vunpack.c.l.s4 1983009808
    %v93 = vunpack.c.0.s8 %v92
    %v94 = vlaneseq
    %v95 = vshrl.u32 %v94, 7
    %v96 = vsub.s32 %v93, %v95
    %v97 = vrot.slane %v89, %v96
    %v99 = vunpack.c.l.s4 1983009808
    %v100 = vunpack.c.0.s8 %v99
    %v101 = vlaneseq
    %v102 = vshrl.u32 %v101, 7
    %v103 = vsub.s32 %v100, %v102
    %v104 = vrot.slane %v90, %v103
    %v105 = vcombine.low %v97, %v104
    %v108 = vmul.f32 %v36, %v88
    %v109 = vmul.f32 %v37, %v105
    %110 = vst [vmem:[#allocation7] sm:$0xff] %v108
    %111 = vst [vmem:[#allocation7 + $0x8] sm:$0xff] %v109
    // Predicated region
    $region18: #{tpu_custom_call.1} parent=1 // pred_check
      _
    $region19: #{tpu_custom_call.1} parent=1 // pred_check_branch
      %113 = sbr.rel (0) target = $region21
    $region20: #{tpu_custom_call.1} parent=1 // pred_region
      %s115 = ssub.s32 256, 256
      %116 = vsyncadd [#allocation4], %s115
      %s118 = sshll.u32 [#allocation7], 4
      %s119 = int_to_ptr.vmem [resolvable:$true] %s118
      %121 = dma.vmem_to_hbm [thread:$0]  %s119, 256, %s2, [#allocation4]
    $region21: #{tpu_custom_call.1} parent=1 // pred_fallthru
      _
    // Predicated region
    $region22: #{tpu_custom_call.1} parent=1 // pred_check
      _
    $region23: #{tpu_custom_call.1} parent=1 // pred_check_branch
      %123 = sbr.rel (0) target = $region25
    $region24: #{tpu_custom_call.1} parent=1 // pred_region
      %124 = dma.done [#allocation4], 256
    $region25: #{tpu_custom_call.1} parent=1 // pred_fallthru
      _
    %125 = vsyncpa [#allocation3], 1
    %126 = vsyncpa [#allocation6], 1
    %127 = vsyncpa [#allocation4], 1

</llo_original>
